<compile_context>
chip_gen: v5e
topology: v5e:2x2
jax: 0.10.0
libtpu: 0.0.40
codegen_flags: <defaults>
</compile_context>

<pallas_src>
import math

import jax
import jax.numpy as jnp
from jax import lax
from jax.experimental import pallas as pl
from jax.experimental.pallas import tpu as pltpu

_CONTRACT_C = (((0,), (0,)), ((), ()))   # contract channel dim 0 of both operands
_NN = (((1,), (0,)), ((), ()))           # plain A @ B


def _regression_kernel(f1_ref, f2_ref, t_ref, w1t_ref, b1_ref, w2t_ref, b2_ref,
                       out_ref, pooled_ref):
    bb, c, n = f1_ref.shape
    inv_sqrt_c = 1.0 / math.sqrt(c)
    inv_n = 1.0 / n

    # bb is a trace-time constant (B folded into one grid step on 1-TC chips,
    # 1 on v7x where the batch rides a 'parallel' grid axis); the loop fully
    # unrolls.  With the column-sum pooling rewrite only one [N,N] score and
    # one [N,N] prob tile are live per iteration, so the bb=2 unroll fits the
    # 64-vreg file without spilling.
    for b in range(bb):
        f1 = f1_ref[b]                    # [C, N] bf16, channels on sublanes, points on lanes
        f2 = f2_ref[b]                    # [C, N] bf16

        # ---- matcher: scaled dot-product correlation + softmax over feat2
        # points.  Transposed-LHS dot form: no materialized f1.T relayout,
        # bf16 operands on the MXU, f32 accumulation.
        s = lax.dot_general(f1, f2, _CONTRACT_C,
                            preferred_element_type=jnp.float32) * inv_sqrt_c    # [N, N] f32
        m = jnp.max(s, axis=-1, keepdims=True)
        p = jnp.exp(s - m)                                                       # [N, N] f32
        inv_l = pl.reciprocal(jnp.sum(p, axis=-1, keepdims=True), approx=True)   # [N, 1]

        # ---- pooled soft-matched features WITHOUT the second big matmul:
        #   mean_n(softmax(s) @ f2^T) == f2 @ (sum_n softmax(s))^T / N.
        # p*inv_l is a VPU lane-broadcast, the n-reduction is an XLU sublane
        # reduce, and the final contraction is a broadcast-multiply + lane
        # reduce -- all in slots the MXU path leaves idle.
        colsum = jnp.sum(p * inv_l, axis=0, keepdims=True)                       # [1, N]
        pooled_m = jnp.sum(f2.astype(jnp.float32) * colsum,
                           axis=-1, keepdims=True) * inv_n                       # [C, 1]
        pooled_f1 = jnp.sum(f1.astype(jnp.float32),
                            axis=-1, keepdims=True) * inv_n                      # [C, 1]
        pooled_ref[0:c, b:b + 1] = pooled_f1
        pooled_ref[c:, b:b + 1] = pooled_m

    # ---- regression head, run once for all folded batch elements: a single
    # [H, 2C] x [2C, bb] layer-1 matmul (contraction depth 2C) and one [16, H]
    # output layer instead of per-batch, per-half width-1 matvecs.
    h = jnp.maximum(
        lax.dot_general(w1t_ref[...], pooled_ref[...], _NN,
                        preferred_element_type=jnp.float32) + b1_ref[...], 0.0)  # [H, bb]
    delta = lax.dot_general(w2t_ref[...], h, _NN,
                            preferred_element_type=jnp.float32) + b2_ref[...]    # [16, bb]

    # ---- fused epilogue: T_result = T_init + delta.  T_init arrives as a
    # row-major [16, 1] view of each 4x4, so no in-kernel reshape is needed.
    for b in range(bb):
        out_ref[b] = t_ref[b] + delta[:, b:b + 1]


def prepare_params(params):
    """One-time parameter layout plumbing, hoisted out of the per-call path:
    transpose the head weights so the MLP runs in column form on the
    channels-first pooled vectors, and reshape the biases to columns."""
    w1, b1, w2, b2 = params
    h = w1.shape[1]
    w1t = jnp.transpose(w1)            # [H, 2C]
    b1c = jnp.reshape(b1, (h, 1))      # [H, 1]
    w2t = jnp.transpose(w2)            # [16, H]
    b2c = jnp.reshape(b2, (16, 1))     # [16, 1]
    return (w1t, b1c, w2t, b2c)


def _fold_batch_into_one_step() -> bool:
    """Single-TensorCore chips (v5e/v6e): fold the whole batch into one grid
    step (kills per-step overhead and repeated weight-block DMAs).  Two-core
    chips (v7x): keep the batch on a 'parallel' grid axis so it shards across
    TensorCores.  Explicit device-kind match; default is to fold.
    TODO(synk): benchmark folded-vs-parallel on real v7x hardware; per-core
    work here is sub-microsecond so the megacore win is not a given."""
    try:
        kind = jax.devices()[0].device_kind.lower()
    except Exception:
        return True
    two_core = any(tag in kind for tag in ("v7", "tpu7", "7x"))
    return not two_core


def small_net_forward(feat1, feat2, T_init, prepared_params):
    """feat1, feat2: [B, C, N] float32 (PyTorch channels-first layout).
    T_init: [B, 4, 4].  prepared_params: output of prepare_params()."""
    B, C, N = feat1.shape
    w1t, b1c, w2t, b2c = prepared_params
    H = w1t.shape[0]

    # bf16 matmul operands (MXU bf16 path, half the feature DMA bytes);
    # accumulation and all softmax math stay f32 inside the kernel.
    f1_bf = feat1.astype(jnp.bfloat16)
    f2_bf = feat2.astype(jnp.bfloat16)
    # Row-major (4,4) -> (16,1) is a pure layout relabel; it lets the kernel
    # fuse the T_init + delta epilogue with no in-kernel reshape.
    t_flat = T_init.astype(jnp.float32).reshape(B, 16, 1)

    bb = B if (_fold_batch_into_one_step() or B == 1) else 1
    grid = (B // bb,)

    flops = B * (2 * N * N * C          # correlation (only big matmul left)
                 + 3 * N * N            # softmax-normalize + column-sum pooling
                 + 3 * C * N            # f2-weighted pool + f1 mean pool
                 + 2 * (2 * C) * H      # MLP layer 1
                 + 2 * H * 16)          # MLP layer 2
    cost = pl.CostEstimate(
        flops=int(flops),
        transcendentals=int(B * (N * N + N)),
        bytes_accessed=int(2 * 2 * B * C * N
                           + 4 * (2 * C * H + H + H * 16 + 16 + 2 * B * 16)),
    )

    out = pl.pallas_call(
        _regression_kernel,
        out_shape=jax.ShapeDtypeStruct((B, 16, 1), jnp.float32),
        grid_spec=pltpu.PrefetchScalarGridSpec(
            num_scalar_prefetch=0,
            grid=grid,
            in_specs=[
                pl.BlockSpec((bb, C, N), lambda b: (b, 0, 0)),
                pl.BlockSpec((bb, C, N), lambda b: (b, 0, 0)),
                pl.BlockSpec((bb, 16, 1), lambda b: (b, 0, 0)),
                pl.BlockSpec((H, 2 * C), lambda b: (0, 0)),
                pl.BlockSpec((H, 1), lambda b: (0, 0)),
                pl.BlockSpec((16, H), lambda b: (0, 0)),
                pl.BlockSpec((16, 1), lambda b: (0, 0)),
            ],
            out_specs=pl.BlockSpec((bb, 16, 1), lambda b: (b, 0, 0)),
            scratch_shapes=[pltpu.VMEM((2 * C, bb), jnp.float32)],
        ),
        compiler_params=pltpu.CompilerParams(
            dimension_semantics=("parallel",)),
        cost_estimate=cost,
    )(f1_bf, f2_bf, t_flat, w1t, b1c, w2t, b2c)

    # (B, 16, 1) -> (B, 4, 4) is a free row-major relabel.
    return out.reshape(B, 4, 4)


def small_net_reference(feat1, feat2, T_init, params):
    """Pure-JAX reference for correctness checking."""
    w1, b1, w2, b2 = params
    f1 = jnp.transpose(feat1, (0, 2, 1)).astype(jnp.float32)
    f2 = jnp.transpose(feat2, (0, 2, 1)).astype(jnp.float32)
    c = f1.shape[-1]
    s = jnp.einsum('bnc,bmc->bnm', f1, f2) / math.sqrt(c)
    attn = jax.nn.softmax(s, axis=-1)
    matched = jnp.einsum('bnm,bmc->bnc', attn, f2)
    pooled = jnp.mean(jnp.concatenate([f1, matched], axis=-1), axis=1)
    h = jnp.maximum(pooled @ w1 + b1, 0.0)
    delta = h @ w2 + b2
    return T_init + delta.reshape(-1, 4, 4)


if __name__ == "__main__":
    B, C, N, H = 2, 32, 128, 64

    key = jax.random.PRNGKey(0)
    kf1, kf2, kw1, kb1, kw2, kb2 = jax.random.split(key, 6)

    feat1 = jax.random.normal(kf1, (B, C, N), jnp.float32)
    feat2 = jax.random.normal(kf2, (B, C, N), jnp.float32)
    T_init = jnp.broadcast_to(jnp.eye(4, dtype=jnp.float32), (B, 4, 4))

    # Deterministic synthetic parameters for the regression MLP head.
    w1 = jax.random.normal(kw1, (2 * C, H), jnp.float32) * 0.05
    b1 = jax.random.normal(kb1, (1, H), jnp.float32) * 0.01
    w2 = jax.random.normal(kw2, (H, 16), jnp.float32) * 0.05
    b2 = jax.random.normal(kb2, (1, 16), jnp.float32) * 0.01
    params = (w1, b1, w2, b2)

    # One-time parameter preprocessing (not in the per-call path).
    prepared = prepare_params(params)

    forward = jax.jit(small_net_forward)
    out = jax.block_until_ready(forward(feat1, feat2, T_init, prepared))

    ref = small_net_reference(feat1, feat2, T_init, params)
    assert out.shape == (B, 4, 4)
    assert jnp.allclose(out, ref, atol=5e-2, rtol=5e-2), "kernel/reference mismatch"

    print("KERNEL_OK")
</pallas_src>

<mosaic_0001>
module attributes {stable_mosaic.version = 11 : i64} {
  func.func @_regression_kernel(%arg0: i32, %arg1: memref<2x32x128xbf16, #tpu.memory_space<vmem>>, %arg2: memref<2x32x128xbf16, #tpu.memory_space<vmem>>, %arg3: memref<2x16x1xf32, #tpu.memory_space<vmem>>, %arg4: memref<64x64xf32, #tpu.memory_space<vmem>>, %arg5: memref<64x1xf32, #tpu.memory_space<vmem>>, %arg6: memref<16x64xf32, #tpu.memory_space<vmem>>, %arg7: memref<16x1xf32, #tpu.memory_space<vmem>>, %arg8: memref<2x16x1xf32, #tpu.memory_space<vmem>>, %arg9: memref<64x2xf32, #tpu.memory_space<vmem>>) attributes {dimension_semantics = [#tpu.dimension_semantics<parallel>], iteration_bounds = array<i64: 1>, scalar_prefetch = 0 : i64, scratch_operands = 1 : i64, tpu.core_type = #tpu.core_type<tc>, window_params = [{transform_indices = @transform_0, window_bounds = array<i64: 2, 32, 128>}, {transform_indices = @transform_1, window_bounds = array<i64: 2, 32, 128>}, {transform_indices = @transform_2, window_bounds = array<i64: 2, 16, 1>}, {pipeline_mode = #tpu.pipeline_mode<synchronous>, transform_indices = @transform_3, window_bounds = array<i64: 64, 64>}, {pipeline_mode = #tpu.pipeline_mode<synchronous>, transform_indices = @transform_4, window_bounds = array<i64: 64, 1>}, {pipeline_mode = #tpu.pipeline_mode<synchronous>, transform_indices = @transform_5, window_bounds = array<i64: 16, 64>}, {pipeline_mode = #tpu.pipeline_mode<synchronous>, transform_indices = @transform_6, window_bounds = array<i64: 16, 1>}, {transform_indices = @transform_7, window_bounds = array<i64: 2, 16, 1>}]} {
    %c0 = arith.constant 0 : index
    %c0_0 = arith.constant 0 : index
    %c0_1 = arith.constant 0 : index
    %0 = vector.load %arg1[%c0, %c0_0, %c0_1] : memref<2x32x128xbf16, #tpu.memory_space<vmem>>, vector<1x32x128xbf16>
    %1 = vector.shape_cast %0 : vector<1x32x128xbf16> to vector<32x128xbf16>
    %c0_2 = arith.constant 0 : index
    %c0_3 = arith.constant 0 : index
    %c0_4 = arith.constant 0 : index
    %2 = vector.load %arg2[%c0_2, %c0_3, %c0_4] : memref<2x32x128xbf16, #tpu.memory_space<vmem>>, vector<1x32x128xbf16>
    %3 = vector.shape_cast %2 : vector<1x32x128xbf16> to vector<32x128xbf16>
    %cst = arith.constant dense<0.000000e+00> : vector<128x128xf32>
    %4 = tpu.matmul %1, %3, %cst {dimension_numbers = #tpu.dot_dimension_numbers<[0], [0], [1], [1], [0, 1, 1, 1], [], []>} : vector<32x128xbf16>, vector<32x128xbf16>, vector<128x128xf32> -> vector<128x128xf32>
    %cst_5 = arith.constant 0.176776692 : f32
    %5 = vector.broadcast %cst_5 : f32 to vector<128x128xf32>
    %6 = arith.mulf %4, %5 : vector<128x128xf32>
    %cst_6 = arith.constant dense<0xFF800000> : vector<128xf32>
    %7 = vector.multi_reduction <maximumf>, %6, %cst_6 [1] : vector<128x128xf32> to vector<128xf32>
    %8 = vector.shape_cast %7 : vector<128xf32> to vector<128x1xf32>
    %9 = vector.broadcast %8 : vector<128x1xf32> to vector<128x128xf32>
    %10 = arith.subf %6, %9 : vector<128x128xf32>
    %11 = math.exp %10 : vector<128x128xf32>
    %cst_7 = arith.constant dense<0.000000e+00> : vector<128xf32>
    %12 = vector.multi_reduction <add>, %11, %cst_7 [1] : vector<128x128xf32> to vector<128xf32>
    %13 = vector.shape_cast %12 : vector<128xf32> to vector<128x1xf32>
    %14 = tpu.reciprocal %13 {approx = true} : vector<128x1xf32> -> vector<128x1xf32>
    %15 = vector.broadcast %14 : vector<128x1xf32> to vector<128x128xf32>
    %16 = arith.mulf %11, %15 : vector<128x128xf32>
    %cst_8 = arith.constant dense<0.000000e+00> : vector<128xf32>
    %17 = vector.multi_reduction <add>, %16, %cst_8 [0] : vector<128x128xf32> to vector<128xf32>
    %18 = vector.shape_cast %17 : vector<128xf32> to vector<1x128xf32>
    %19 = arith.extf %3 : vector<32x128xbf16> to vector<32x128xf32>
    %20 = vector.broadcast %18 : vector<1x128xf32> to vector<32x128xf32>
    %21 = arith.mulf %19, %20 : vector<32x128xf32>
    %cst_9 = arith.constant dense<0.000000e+00> : vector<32xf32>
    %22 = vector.multi_reduction <add>, %21, %cst_9 [1] : vector<32x128xf32> to vector<32xf32>
    %23 = vector.shape_cast %22 : vector<32xf32> to vector<32x1xf32>
    %cst_10 = arith.constant 7.812500e-03 : f32
    %24 = vector.broadcast %cst_10 : f32 to vector<32x1xf32>
    %25 = arith.mulf %23, %24 : vector<32x1xf32>
    %26 = arith.extf %1 : vector<32x128xbf16> to vector<32x128xf32>
    %cst_11 = arith.constant dense<0.000000e+00> : vector<32xf32>
    %27 = vector.multi_reduction <add>, %26, %cst_11 [1] : vector<32x128xf32> to vector<32xf32>
    %28 = vector.shape_cast %27 : vector<32xf32> to vector<32x1xf32>
    %cst_12 = arith.constant 7.812500e-03 : f32
    %29 = vector.broadcast %cst_12 : f32 to vector<32x1xf32>
    %30 = arith.mulf %28, %29 : vector<32x1xf32>
    %c0_13 = arith.constant 0 : index
    %c0_14 = arith.constant 0 : index
    %31 = vector.load %arg9[%c0_13, %c0_14] : memref<64x2xf32, #tpu.memory_space<vmem>>, vector<32x1xf32>
    tpu.vector_store %arg9[%c0_13, %c0_14], %30 {strides = array<i32>} : memref<64x2xf32, #tpu.memory_space<vmem>>, vector<32x1xf32>,
    %c32 = arith.constant 32 : index
    %c0_15 = arith.constant 0 : index
    %32 = vector.load %arg9[%c32, %c0_15] : memref<64x2xf32, #tpu.memory_space<vmem>>, vector<32x1xf32>
    tpu.vector_store %arg9[%c32, %c0_15], %25 {strides = array<i32>} : memref<64x2xf32, #tpu.memory_space<vmem>>, vector<32x1xf32>,
    %c1 = arith.constant 1 : index
    %c0_16 = arith.constant 0 : index
    %c0_17 = arith.constant 0 : index
    %33 = vector.load %arg1[%c1, %c0_16, %c0_17] : memref<2x32x128xbf16, #tpu.memory_space<vmem>>, vector<1x32x128xbf16>
    %34 = vector.shape_cast %33 : vector<1x32x128xbf16> to vector<32x128xbf16>
    %c1_18 = arith.constant 1 : index
    %c0_19 = arith.constant 0 : index
    %c0_20 = arith.constant 0 : index
    %35 = vector.load %arg2[%c1_18, %c0_19, %c0_20] : memref<2x32x128xbf16, #tpu.memory_space<vmem>>, vector<1x32x128xbf16>
    %36 = vector.shape_cast %35 : vector<1x32x128xbf16> to vector<32x128xbf16>
    %cst_21 = arith.constant dense<0.000000e+00> : vector<128x128xf32>
    %37 = tpu.matmul %34, %36, %cst_21 {dimension_numbers = #tpu.dot_dimension_numbers<[0], [0], [1], [1], [0, 1, 1, 1], [], []>} : vector<32x128xbf16>, vector<32x128xbf16>, vector<128x128xf32> -> vector<128x128xf32>
    %cst_22 = arith.constant 0.176776692 : f32
    %38 = vector.broadcast %cst_22 : f32 to vector<128x128xf32>
    %39 = arith.mulf %37, %38 : vector<128x128xf32>
    %cst_23 = arith.constant dense<0xFF800000> : vector<128xf32>
    %40 = vector.multi_reduction <maximumf>, %39, %cst_23 [1] : vector<128x128xf32> to vector<128xf32>
    %41 = vector.shape_cast %40 : vector<128xf32> to vector<128x1xf32>
    %42 = vector.broadcast %41 : vector<128x1xf32> to vector<128x128xf32>
    %43 = arith.subf %39, %42 : vector<128x128xf32>
    %44 = math.exp %43 : vector<128x128xf32>
    %cst_24 = arith.constant dense<0.000000e+00> : vector<128xf32>
    %45 = vector.multi_reduction <add>, %44, %cst_24 [1] : vector<128x128xf32> to vector<128xf32>
    %46 = vector.shape_cast %45 : vector<128xf32> to vector<128x1xf32>
    %47 = tpu.reciprocal %46 {approx = true} : vector<128x1xf32> -> vector<128x1xf32>
    %48 = vector.broadcast %47 : vector<128x1xf32> to vector<128x128xf32>
    %49 = arith.mulf %44, %48 : vector<128x128xf32>
    %cst_25 = arith.constant dense<0.000000e+00> : vector<128xf32>
    %50 = vector.multi_reduction <add>, %49, %cst_25 [0] : vector<128x128xf32> to vector<128xf32>
    %51 = vector.shape_cast %50 : vector<128xf32> to vector<1x128xf32>
    %52 = arith.extf %36 : vector<32x128xbf16> to vector<32x128xf32>
    %53 = vector.broadcast %51 : vector<1x128xf32> to vector<32x128xf32>
    %54 = arith.mulf %52, %53 : vector<32x128xf32>
    %cst_26 = arith.constant dense<0.000000e+00> : vector<32xf32>
    %55 = vector.multi_reduction <add>, %54, %cst_26 [1] : vector<32x128xf32> to vector<32xf32>
    %56 = vector.shape_cast %55 : vector<32xf32> to vector<32x1xf32>
    %cst_27 = arith.constant 7.812500e-03 : f32
    %57 = vector.broadcast %cst_27 : f32 to vector<32x1xf32>
    %58 = arith.mulf %56, %57 : vector<32x1xf32>
    %59 = arith.extf %34 : vector<32x128xbf16> to vector<32x128xf32>
    %cst_28 = arith.constant dense<0.000000e+00> : vector<32xf32>
    %60 = vector.multi_reduction <add>, %59, %cst_28 [1] : vector<32x128xf32> to vector<32xf32>
    %61 = vector.shape_cast %60 : vector<32xf32> to vector<32x1xf32>
    %cst_29 = arith.constant 7.812500e-03 : f32
    %62 = vector.broadcast %cst_29 : f32 to vector<32x1xf32>
    %63 = arith.mulf %61, %62 : vector<32x1xf32>
    %c0_30 = arith.constant 0 : index
    %c1_31 = arith.constant 1 : index
    %64 = vector.load %arg9[%c0_30, %c1_31] : memref<64x2xf32, #tpu.memory_space<vmem>>, vector<32x1xf32>
    tpu.vector_store %arg9[%c0_30, %c1_31], %63 {strides = array<i32>} : memref<64x2xf32, #tpu.memory_space<vmem>>, vector<32x1xf32>,
    %c32_32 = arith.constant 32 : index
    %c1_33 = arith.constant 1 : index
    %65 = vector.load %arg9[%c32_32, %c1_33] : memref<64x2xf32, #tpu.memory_space<vmem>>, vector<32x1xf32>
    tpu.vector_store %arg9[%c32_32, %c1_33], %58 {strides = array<i32>} : memref<64x2xf32, #tpu.memory_space<vmem>>, vector<32x1xf32>,
    %c0_34 = arith.constant 0 : index
    %c0_35 = arith.constant 0 : index
    %66 = vector.load %arg4[%c0_34, %c0_35] : memref<64x64xf32, #tpu.memory_space<vmem>>, vector<64x64xf32>
    %c0_36 = arith.constant 0 : index
    %c0_37 = arith.constant 0 : index
    %67 = vector.load %arg9[%c0_36, %c0_37] : memref<64x2xf32, #tpu.memory_space<vmem>>, vector<64x2xf32>
    %cst_38 = arith.constant dense<0.000000e+00> : vector<64x2xf32>
    %68 = tpu.matmul %66, %67, %cst_38 {dimension_numbers = #tpu.dot_dimension_numbers<[1], [0], [0], [1], [0, 0, 1, 1], [], []>} : vector<64x64xf32>, vector<64x2xf32>, vector<64x2xf32> -> vector<64x2xf32>
    %c0_39 = arith.constant 0 : index
    %c0_40 = arith.constant 0 : index
    %69 = vector.load %arg5[%c0_39, %c0_40] : memref<64x1xf32, #tpu.memory_space<vmem>>, vector<64x1xf32>
    %70 = vector.broadcast %69 : vector<64x1xf32> to vector<64x2xf32>
    %71 = arith.addf %68, %70 : vector<64x2xf32>
    %cst_41 = arith.constant 0.000000e+00 : f32
    %72 = vector.broadcast %cst_41 : f32 to vector<64x2xf32>
    %73 = arith.maximumf %71, %72 : vector<64x2xf32>
    %c0_42 = arith.constant 0 : index
    %c0_43 = arith.constant 0 : index
    %74 = vector.load %arg6[%c0_42, %c0_43] : memref<16x64xf32, #tpu.memory_space<vmem>>, vector<16x64xf32>
    %cst_44 = arith.constant dense<0.000000e+00> : vector<16x2xf32>
    %75 = tpu.matmul %74, %73, %cst_44 {dimension_numbers = #tpu.dot_dimension_numbers<[1], [0], [0], [1], [0, 0, 1, 1], [], []>} : vector<16x64xf32>, vector<64x2xf32>, vector<16x2xf32> -> vector<16x2xf32>
    %c0_45 = arith.constant 0 : index
    %c0_46 = arith.constant 0 : index
    %76 = vector.load %arg7[%c0_45, %c0_46] : memref<16x1xf32, #tpu.memory_space<vmem>>, vector<16x1xf32>
    %77 = vector.broadcast %76 : vector<16x1xf32> to vector<16x2xf32>
    %78 = arith.addf %75, %77 : vector<16x2xf32>
    %c0_47 = arith.constant 0 : index
    %c0_48 = arith.constant 0 : index
    %c0_49 = arith.constant 0 : index
    %79 = vector.load %arg3[%c0_47, %c0_48, %c0_49] : memref<2x16x1xf32, #tpu.memory_space<vmem>>, vector<1x16x1xf32>
    %80 = vector.shape_cast %79 : vector<1x16x1xf32> to vector<16x1xf32>
    %81 = vector.extract_strided_slice %78 {offsets = [0, 0], sizes = [16, 1], strides = [1, 1]} : vector<16x2xf32> to vector<16x1xf32>
    %82 = arith.addf %80, %81 : vector<16x1xf32>
    %c0_50 = arith.constant 0 : index
    %c0_51 = arith.constant 0 : index
    %c0_52 = arith.constant 0 : index
    %83 = vector.load %arg8[%c0_50, %c0_51, %c0_52] : memref<2x16x1xf32, #tpu.memory_space<vmem>>, vector<1x16x1xf32>
    %84 = vector.shape_cast %83 : vector<1x16x1xf32> to vector<16x1xf32>
    %85 = vector.shape_cast %82 : vector<16x1xf32> to vector<1x16x1xf32>
    tpu.vector_store %arg8[%c0_50, %c0_51, %c0_52], %85 {strides = array<i32>} : memref<2x16x1xf32, #tpu.memory_space<vmem>>, vector<1x16x1xf32>,
    %c1_53 = arith.constant 1 : index
    %c0_54 = arith.constant 0 : index
    %c0_55 = arith.constant 0 : index
    %86 = vector.load %arg3[%c1_53, %c0_54, %c0_55] : memref<2x16x1xf32, #tpu.memory_space<vmem>>, vector<1x16x1xf32>
    %87 = vector.shape_cast %86 : vector<1x16x1xf32> to vector<16x1xf32>
    %88 = vector.extract_strided_slice %78 {offsets = [0, 1], sizes = [16, 1], strides = [1, 1]} : vector<16x2xf32> to vector<16x1xf32>
    %89 = arith.addf %87, %88 : vector<16x1xf32>
    %c1_56 = arith.constant 1 : index
    %c0_57 = arith.constant 0 : index
    %c0_58 = arith.constant 0 : index
    %90 = vector.load %arg8[%c1_56, %c0_57, %c0_58] : memref<2x16x1xf32, #tpu.memory_space<vmem>>, vector<1x16x1xf32>
    %91 = vector.shape_cast %90 : vector<1x16x1xf32> to vector<16x1xf32>
    %92 = vector.shape_cast %89 : vector<16x1xf32> to vector<1x16x1xf32>
    tpu.vector_store %arg8[%c1_56, %c0_57, %c0_58], %92 {strides = array<i32>} : memref<2x16x1xf32, #tpu.memory_space<vmem>>, vector<1x16x1xf32>,
    return
  }
  func.func @transform_0(%arg0: i32) -> (i32, i32, i32) {
    %c0_i32 = arith.constant 0 : i32
    %c0_i32_0 = arith.constant 0 : i32
    %c0_i32_1 = arith.constant 0 : i32
    return %arg0, %c0_i32, %c0_i32_0 : i32, i32, i32
  }
  func.func @transform_1(%arg0: i32) -> (i32, i32, i32) {
    %c0_i32 = arith.constant 0 : i32
    %c0_i32_0 = arith.constant 0 : i32
    %c0_i32_1 = arith.constant 0 : i32
    return %arg0, %c0_i32, %c0_i32_0 : i32, i32, i32
  }
  func.func @transform_2(%arg0: i32) -> (i32, i32, i32) {
    %c0_i32 = arith.constant 0 : i32
    %c0_i32_0 = arith.constant 0 : i32
    %c0_i32_1 = arith.constant 0 : i32
    return %arg0, %c0_i32, %c0_i32_0 : i32, i32, i32
  }
  func.func @transform_3(%arg0: i32) -> (i32, i32) {
    %c0_i32 = arith.constant 0 : i32
    %c0_i32_0 = arith.constant 0 : i32
    %c0_i32_1 = arith.constant 0 : i32
    return %c0_i32, %c0_i32_0 : i32, i32
  }
  func.func @transform_4(%arg0: i32) -> (i32, i32) {
    %c0_i32 = arith.constant 0 : i32
    %c0_i32_0 = arith.constant 0 : i32
    %c0_i32_1 = arith.constant 0 : i32
    return %c0_i32, %c0_i32_0 : i32, i32
  }
  func.func @transform_5(%arg0: i32) -> (i32, i32) {
    %c0_i32 = arith.constant 0 : i32
    %c0_i32_0 = arith.constant 0 : i32
    %c0_i32_1 = arith.constant 0 : i32
    return %c0_i32, %c0_i32_0 : i32, i32
  }
  func.func @transform_6(%arg0: i32) -> (i32, i32) {
    %c0_i32 = arith.constant 0 : i32
    %c0_i32_0 = arith.constant 0 : i32
    %c0_i32_1 = arith.constant 0 : i32
    return %c0_i32, %c0_i32_0 : i32, i32
  }
  func.func @transform_7(%arg0: i32) -> (i32, i32, i32) {
    %c0_i32 = arith.constant 0 : i32
    %c0_i32_0 = arith.constant 0 : i32
    %c0_i32_1 = arith.constant 0 : i32
    return %arg0, %c0_i32, %c0_i32_0 : i32, i32, i32
  }
}

</mosaic_0001>

<llo_original>
// kernel: small_net_forward.1
$region0: #{small_net_forward.1}
  #allocation0 [shape = 'u32[]', space=smem, size = 0x4, offset = 0x4, fixed_abs, tag = 'smem constant byte address 0x4 - core index']
  #allocation1 [shape = 'u32[72,128]{1,0:T(1,128)}', space=vmem, size = 0x9000, scoped, tag = 'internal scratch']
  #allocation2 [shape = 'f32[64,2]{1,0:T(8,128)}', space=vmem, size = 0x8000, scoped, tag = 'scratch operand']
  %s0 = inlined_call_operand.vmem [shape: bf16[2,32,128], index: 0, kind: input, shape index: {}]
  %s1 = inlined_call_operand.vmem [shape: bf16[2,32,128], index: 1, kind: input, shape index: {}]
  %s2 = inlined_call_operand.vmem [shape: f32[2,16,1], index: 2, kind: input, shape index: {}]
  %s3 = inlined_call_operand.vmem [shape: f32[64,64], index: 3, kind: input, shape index: {}]
  %s4 = inlined_call_operand.vmem [shape: f32[64,1], index: 4, kind: input, shape index: {}]
  %s5 = inlined_call_operand.vmem [shape: f32[16,64], index: 5, kind: input, shape index: {}]
  %s6 = inlined_call_operand.vmem [shape: f32[16,1], index: 6, kind: input, shape index: {}]
  %s7 = inlined_call_operand.vmem [shape: f32[2,16,1], index: 7, kind: output, shape index: {}]
  %s8 = sld [smem:[#allocation0]]
  $region38: #{small_net_forward.1} parent=0
    _
  %s10 = ssub.s32 1, %s8
  %s11 = scalar_select 0, %s10, %s8
  // Predicated region
  $region2: #{small_net_forward.1} parent=0 // pred_check
    _
  $region3: #{small_net_forward.1} parent=0 // pred_check_branch
    %13 = sbr.rel (0) target = $region5
  $region4: #{small_net_forward.1} parent=0 // pred_region
    _
  $region5: #{small_net_forward.1} parent=0 // pred_fallthru
    _
  // Predicated region
  $region6: #{small_net_forward.1} parent=0 // pred_check
    _
  $region7: #{small_net_forward.1} parent=0 // pred_check_branch
    %15 = sbr.rel (0) target = $region9
  $region8: #{small_net_forward.1} parent=0 // pred_region
    _
  $region9: #{small_net_forward.1} parent=0 // pred_fallthru
    _
  // Predicated region
  $region10: #{small_net_forward.1} parent=0 // pred_check
    _
  $region11: #{small_net_forward.1} parent=0 // pred_check_branch
    %17 = sbr.rel (0) target = $region13
  $region12: #{small_net_forward.1} parent=0 // pred_region
    _
  $region13: #{small_net_forward.1} parent=0 // pred_fallthru
    _
  // Predicated region
  $region14: #{small_net_forward.1} parent=0 // pred_check
    _
  $region15: #{small_net_forward.1} parent=0 // pred_check_branch
    %19 = sbr.rel (0) target = $region17
  $region16: #{small_net_forward.1} parent=0 // pred_region
    _
  $region17: #{small_net_forward.1} parent=0 // pred_fallthru
    _
  // Predicated region
  $region18: #{small_net_forward.1} parent=0 // pred_check
    _
  $region19: #{small_net_forward.1} parent=0 // pred_check_branch
    %21 = sbr.rel (0) target = $region21
  $region20: #{small_net_forward.1} parent=0 // pred_region
    _
  $region21: #{small_net_forward.1} parent=0 // pred_fallthru
    _
  // Predicated region
  $region22: #{small_net_forward.1} parent=0 // pred_check
    _
  $region23: #{small_net_forward.1} parent=0 // pred_check_branch
    %23 = sbr.rel (0) target = $region25
  $region24: #{small_net_forward.1} parent=0 // pred_region
    _
  $region25: #{small_net_forward.1} parent=0 // pred_fallthru
    _
  // Predicated region
  $region26: #{small_net_forward.1} parent=0 // pred_check
    _
  $region27: #{small_net_forward.1} parent=0 // pred_check_branch
    %25 = sbr.rel (0) target = $region29
  $region28: #{small_net_forward.1} parent=0 // pred_region
    _
  $region29: #{small_net_forward.1} parent=0 // pred_fallthru
    _
  %v27 = vld [vmem:[%s0] sm:$0xf]
  %v28 = vld [vmem:[%s0 + $0x4] sm:$0xf]
  %v29 = vld [vmem:[%s0 + $0x8] sm:$0xf]
  %v30 = vld [vmem:[%s0 + $0xc] sm:$0xf]
  %v31 = vld [vmem:[%s1] sm:$0xf]
  %v32 = vld [vmem:[%s1 + $0x4] sm:$0xf]
  %v33 = vld [vmem:[%s1 + $0x8] sm:$0xf]
  %v34 = vld [vmem:[%s1 + $0xc] sm:$0xf]
  %v39 = vunpack.c.l.b16 %v27
  %v40 = vunpack.c.l.b16 %v28
  %v41 = vunpack.c.l.b16 %v29
  %v42 = vunpack.c.l.b16 %v30
  %v43 = vpack.c.b16 %v40, %v39
  %v44 = vpack.c.b16 %v42, %v41
  %47 = vxpose.xlu0.c.b16.start [1/8] %v43, 128
  %48 = vxpose.xlu0.c.b16.cont [2/8] %v44, 128
  %49 = vxpose.xlu0.c.b16.cont [3/8] 0, 128
  %50 = vxpose.xlu0.c.b16.cont [4/8] 0, 128
  %51 = vxpose.xlu0.c.b16.cont [5/8] 0, 128
  %52 = vxpose.xlu0.c.b16.cont [6/8] 0, 128
  %53 = vxpose.xlu0.c.b16.cont [7/8] 0, 128
  %54 = vxpose.xlu0.c.b16.end [8/8] 0, 128
  %v55 = vpop.trf.xlu0
  %v56 = vpop.trf.xlu0
  %v57 = vpop.trf.xlu0
  %v58 = vpop.trf.xlu0
  %v59 = vpop.trf.xlu0
  %v60 = vpop.trf.xlu0
  %v61 = vpop.trf.xlu0
  %v62 = vpop.trf.xlu0
  %v67 = vunpack.c.l.b16 %v31
  %v68 = vunpack.c.l.b16 %v32
  %v69 = vunpack.c.l.b16 %v33
  %v70 = vunpack.c.l.b16 %v34
  %v71 = vpack.c.b16 %v68, %v67
  %v72 = vpack.c.b16 %v70, %v69
  %vm75 = vcmask 261120
  %v77 = vsel %vm75, %v55, 0
  %v80 = vsel %vm75, %v56, 0
  %v83 = vsel %vm75, %v57, 0
  %v86 = vsel %vm75, %v58, 0
  %v89 = vsel %vm75, %v59, 0
  %v92 = vsel %vm75, %v60, 0
  %v95 = vsel %vm75, %v61, 0
  %v98 = vsel %vm75, %v62, 0
  %100 = vmatpush.bf16.msra.mxu0 0
  %101 = vmatpush.bf16.msra.mxu0 0
  %102 = vmatpush.bf16.msra.mxu0 0
  %103 = vmatpush.bf16.msra.mxu0 0
  %104 = vmatpush.bf16.msra.mxu0 0
  %105 = vmatpush.bf16.msra.mxu0 0
  %106 = vmatpush.bf16.msra.mxu0 %v72
  %107 = vmatpush.bf16.msra.mxu0 %v71
  %108 = vmatmul.bf16.gmra.mxu0 %v77
  %v109 = vpop.f32.mrf.mxu0
  %v110 = vadd.f32 0.0, %v109
  %v111 = vpop.f32.mrf.mxu0
  %v112 = vadd.f32 0.0, %v111
  %113 = vmatmul.bf16.gmra.mxu0 %v80
  %v114 = vpop.f32.mrf.mxu0
  %v115 = vadd.f32 0.0, %v114
  %v116 = vpop.f32.mrf.mxu0
  %v117 = vadd.f32 0.0, %v116
  %118 = vmatmul.bf16.gmra.mxu0 %v83
  %v119 = vpop.f32.mrf.mxu0
  %v120 = vadd.f32 0.0, %v119
  %v121 = vpop.f32.mrf.mxu0
  %v122 = vadd.f32 0.0, %v121
  %123 = vmatmul.bf16.gmra.mxu0 %v86
  %v124 = vpop.f32.mrf.mxu0
  %v125 = vadd.f32 0.0, %v124
  %v126 = vpop.f32.mrf.mxu0
  %v127 = vadd.f32 0.0, %v126
  %128 = vmatmul.bf16.gmra.mxu0 %v89
  %v129 = vpop.f32.mrf.mxu0
  %v130 = vadd.f32 0.0, %v129
  %v131 = vpop.f32.mrf.mxu0
  %v132 = vadd.f32 0.0, %v131
  %133 = vmatmul.bf16.gmra.mxu0 %v92
  %v134 = vpop.f32.mrf.mxu0
  %v135 = vadd.f32 0.0, %v134
  %v136 = vpop.f32.mrf.mxu0
  %v137 = vadd.f32 0.0, %v136
  %138 = vmatmul.bf16.gmra.mxu0 %v95
  %v139 = vpop.f32.mrf.mxu0
  %v140 = vadd.f32 0.0, %v139
  %v141 = vpop.f32.mrf.mxu0
  %v142 = vadd.f32 0.0, %v141
  %143 = vmatmul.bf16.gmra.mxu0 %v98
  %v144 = vpop.f32.mrf.mxu0
  %v145 = vadd.f32 0.0, %v144
  %v146 = vpop.f32.mrf.mxu0
  %v147 = vadd.f32 0.0, %v146
  %148 = vdwg.mxu0
  %v149 = vmul.f32 %v110, 0.17677669
  %v150 = vmul.f32 %v112, 0.17677669
  %v151 = vmul.f32 %v115, 0.17677669
  %v152 = vmul.f32 %v117, 0.17677669
  %v153 = vmul.f32 %v120, 0.17677669
  %v154 = vmul.f32 %v122, 0.17677669
  %v155 = vmul.f32 %v125, 0.17677669
  %v156 = vmul.f32 %v127, 0.17677669
  %v157 = vmul.f32 %v130, 0.17677669
  %v158 = vmul.f32 %v132, 0.17677669
  %v159 = vmul.f32 %v135, 0.17677669
  %v160 = vmul.f32 %v137, 0.17677669
  %v161 = vmul.f32 %v140, 0.17677669
  %v162 = vmul.f32 %v142, 0.17677669
  %v163 = vmul.f32 %v145, 0.17677669
  %v164 = vmul.f32 %v147, 0.17677669
  %165 = vmax.xlane.f32.xlu0 %v149
  %v166 = vpop.xlane.xlu0 %165
  %167 = vmax.xlane.f32.xlu0 %v150
  %v168 = vpop.xlane.xlu0 %167
  %169 = vmax.xlane.f32.xlu0 %v151
  %v170 = vpop.xlane.xlu0 %169
  %171 = vmax.xlane.f32.xlu0 %v152
  %v172 = vpop.xlane.xlu0 %171
  %173 = vmax.xlane.f32.xlu0 %v153
  %v174 = vpop.xlane.xlu0 %173
  %175 = vmax.xlane.f32.xlu0 %v154
  %v176 = vpop.xlane.xlu0 %175
  %177 = vmax.xlane.f32.xlu0 %v155
  %v178 = vpop.xlane.xlu0 %177
  %179 = vmax.xlane.f32.xlu0 %v156
  %v180 = vpop.xlane.xlu0 %179
  %181 = vmax.xlane.f32.xlu0 %v157
  %v182 = vpop.xlane.xlu0 %181
  %183 = vmax.xlane.f32.xlu0 %v158
  %v184 = vpop.xlane.xlu0 %183
  %185 = vmax.xlane.f32.xlu0 %v159
  %v186 = vpop.xlane.xlu0 %185
  %187 = vmax.xlane.f32.xlu0 %v160
  %v188 = vpop.xlane.xlu0 %187
  %189 = vmax.xlane.f32.xlu0 %v161
  %v190 = vpop.xlane.xlu0 %189
  %191 = vmax.xlane.f32.xlu0 %v162
  %v192 = vpop.xlane.xlu0 %191
  %193 = vmax.xlane.f32.xlu0 %v163
  %v194 = vpop.xlane.xlu0 %193
  %195 = vmax.xlane.f32.xlu0 %v164
  %v196 = vpop.xlane.xlu0 %195
  %v197 = vsub.f32 %v149, %v166
  %v198 = vsub.f32 %v150, %v168
  %v199 = vsub.f32 %v151, %v170
  %v200 = vsub.f32 %v152, %v172
  %v201 = vsub.f32 %v153, %v174
  %v202 = vsub.f32 %v154, %v176
  %v203 = vsub.f32 %v155, %v178
  %v204 = vsub.f32 %v156, %v180
  %v205 = vsub.f32 %v157, %v182
  %v206 = vsub.f32 %v158, %v184
  %v207 = vsub.f32 %v159, %v186
  %v208 = vsub.f32 %v160, %v188
  %v209 = vsub.f32 %v161, %v190
  %v210 = vsub.f32 %v162, %v192
  %v211 = vsub.f32 %v163, %v194
  %v212 = vsub.f32 %v164, %v196
  %v213 = vmul.f32 %v197, 1.442695
  %v214 = vpow.pop %v213
  %v215 = vmul.f32 %v198, 1.442695
  %v216 = vpow.pop %v215
  %v217 = vmul.f32 %v199, 1.442695
  %v218 = vpow.pop %v217
  %v219 = vmul.f32 %v200, 1.442695
  %v220 = vpow.pop %v219
  %v221 = vmul.f32 %v201, 1.442695
  %v222 = vpow.pop %v221
  %v223 = vmul.f32 %v202, 1.442695
  %v224 = vpow.pop %v223
  %v225 = vmul.f32 %v203, 1.442695
  %v226 = vpow.pop %v225
  %v227 = vmul.f32 %v204, 1.442695
  %v228 = vpow.pop %v227
  %v229 = vmul.f32 %v205, 1.442695
  %v230 = vpow.pop %v229
  %v231 = vmul.f32 %v206, 1.442695
  %v232 = vpow.pop %v231
  %v233 = vmul.f32 %v207, 1.442695
  %v234 = vpow.pop %v233
  %v235 = vmul.f32 %v208, 1.442695
  %v236 = vpow.pop %v235
  %v237 = vmul.f32 %v209, 1.442695
  %v238 = vpow.pop %v237
  %v239 = vmul.f32 %v210, 1.442695
  %v240 = vpow.pop %v239
  %v241 = vmul.f32 %v211, 1.442695
  %v242 = vpow.pop %v241
  %v243 = vmul.f32 %v212, 1.442695
  %v244 = vpow.pop %v243
  %245 = vadd.xlane.f32.xlu0 %v214
  %v246 = vpop.xlane.xlu0 %245
  %247 = vadd.xlane.f32.xlu0 %v216
  %v248 = vpop.xlane.xlu0 %247
  %249 = vadd.xlane.f32.xlu0 %v218
  %v250 = vpop.xlane.xlu0 %249
  %251 = vadd.xlane.f32.xlu0 %v220
  %v252 = vpop.xlane.xlu0 %251
  %253 = vadd.xlane.f32.xlu0 %v222
  %v254 = vpop.xlane.xlu0 %253
  %255 = vadd.xlane.f32.xlu0 %v224
  %v256 = vpop.xlane.xlu0 %255
  %257 = vadd.xlane.f32.xlu0 %v226
  %v258 = vpop.xlane.xlu0 %257
  %259 = vadd.xlane.f32.xlu0 %v228
  %v260 = vpop.xlane.xlu0 %259
  %261 = vadd.xlane.f32.xlu0 %v230
  %v262 = vpop.xlane.xlu0 %261
  %263 = vadd.xlane.f32.xlu0 %v232
  %v264 = vpop.xlane.xlu0 %263
  %265 = vadd.xlane.f32.xlu0 %v234
  %v266 = vpop.xlane.xlu0 %265
  %267 = vadd.xlane.f32.xlu0 %v236
  %v268 = vpop.xlane.xlu0 %267
  %269 = vadd.xlane.f32.xlu0 %v238
  %v270 = vpop.xlane.xlu0 %269
  %271 = vadd.xlane.f32.xlu0 %v240
  %v272 = vpop.xlane.xlu0 %271
  %273 = vadd.xlane.f32.xlu0 %v242
  %v274 = vpop.xlane.xlu0 %273
  %275 = vadd.xlane.f32.xlu0 %v244
  %v276 = vpop.xlane.xlu0 %275
  %v277 = vrcp.pop %v246
  %v278 = vrcp.pop %v248
  %v279 = vrcp.pop %v250
  %v280 = vrcp.pop %v252
  %v281 = vrcp.pop %v254
  %v282 = vrcp.pop %v256
  %v283 = vrcp.pop %v258
  %v284 = vrcp.pop %v260
  %v285 = vrcp.pop %v262
  %v286 = vrcp.pop %v264
  %v287 = vrcp.pop %v266
  %v288 = vrcp.pop %v268
  %v289 = vrcp.pop %v270
  %v290 = vrcp.pop %v272
  %v291 = vrcp.pop %v274
  %v292 = vrcp.pop %v276
  %v293 = vmul.f32 %v214, %v277
  %v294 = vmul.f32 %v216, %v278
  %v295 = vmul.f32 %v218, %v279
  %v296 = vmul.f32 %v220, %v280
  %v297 = vmul.f32 %v222, %v281
  %v298 = vmul.f32 %v224, %v282
  %v299 = vmul.f32 %v226, %v283
  %v300 = vmul.f32 %v228, %v284
  %v301 = vmul.f32 %v230, %v285
  %v302 = vmul.f32 %v232, %v286
  %v303 = vmul.f32 %v234, %v287
  %v304 = vmul.f32 %v236, %v288
  %v305 = vmul.f32 %v238, %v289
  %v306 = vmul.f32 %v240, %v290
  %v307 = vmul.f32 %v242, %v291
  %v308 = vmul.f32 %v244, %v292
  %v309 = vadd.f32 %v293, %v294
  %v310 = vadd.f32 %v309, %v295
  %v311 = vadd.f32 %v310, %v296
  %v312 = vadd.f32 %v311, %v297
  %v313 = vadd.f32 %v312, %v298
  %v314 = vadd.f32 %v313, %v299
  %v315 = vadd.f32 %v314, %v300
  %v316 = vadd.f32 %v315, %v301
  %v317 = vadd.f32 %v316, %v302
  %v318 = vadd.f32 %v317, %v303
  %v319 = vadd.f32 %v318, %v304
  %v320 = vadd.f32 %v319, %v305
  %v321 = vadd.f32 %v320, %v306
  %v322 = vadd.f32 %v321, %v307
  %v323 = vadd.f32 %v322, %v308
  %v324 = vrot.slane %v323, 4
  %v325 = vadd.f32 %v323, %v324
  %v326 = vrot.slane %v325, 2
  %v327 = vadd.f32 %v325, %v326
  %v328 = vrot.slane %v327, 1
  %v329 = vadd.f32 %v327, %v328
  %v330 = vunpack.c.l.bf16 %v31
  %v331 = vunpack.c.l.bf16 %v32
  %v332 = vunpack.c.l.bf16 %v33
  %v333 = vunpack.c.l.bf16 %v34
  %v334 = vmul.f32 %v330, %v329
  %v335 = vmul.f32 %v331, %v329
  %v336 = vmul.f32 %v332, %v329
  %v337 = vmul.f32 %v333, %v329
  %338 = vadd.xlane.f32.xlu0 %v334
  %v339 = vpop.xlane.xlu0 %338
  %340 = vadd.xlane.f32.xlu0 %v335
  %v341 = vpop.xlane.xlu0 %340
  %342 = vadd.xlane.f32.xlu0 %v336
  %v343 = vpop.xlane.xlu0 %342
  %344 = vadd.xlane.f32.xlu0 %v337
  %v345 = vpop.xlane.xlu0 %344
  %v346 = vmul.f32 %v339, 0.0078125
  %v347 = vmul.f32 %v341, 0.0078125
  %v348 = vmul.f32 %v343, 0.0078125
  %v349 = vmul.f32 %v345, 0.0078125
  %v350 = vunpack.c.l.bf16 %v27
  %v351 = vunpack.c.l.bf16 %v28
  %v352 = vunpack.c.l.bf16 %v29
  %v353 = vunpack.c.l.bf16 %v30
  %354 = vadd.xlane.f32.xlu0 %v350
  %v355 = vpop.xlane.xlu0 %354
  %356 = vadd.xlane.f32.xlu0 %v351
  %v357 = vpop.xlane.xlu0 %356
  %358 = vadd.xlane.f32.xlu0 %v352
  %v359 = vpop.xlane.xlu0 %358
  %360 = vadd.xlane.f32.xlu0 %v353
  %v361 = vpop.xlane.xlu0 %360
  %v362 = vmul.f32 %v355, 0.0078125
  %v363 = vmul.f32 %v357, 0.0078125
  %v364 = vmul.f32 %v359, 0.0078125
  %v365 = vmul.f32 %v361, 0.0078125
  %vm366 = vcmask 7168
  %367 = vst.msk [vmem:[#allocation2] sm:$0xff] %vm366, %v362
  %368 = vst.msk [vmem:[#allocation2 + $0x8] sm:$0xff] %vm366, %v363
  %369 = vst.msk [vmem:[#allocation2 + $0x10] sm:$0xff] %vm366, %v364
  %370 = vst.msk [vmem:[#allocation2 + $0x18] sm:$0xff] %vm366, %v365
  %371 = vst.msk [vmem:[#allocation2 + $0x20] sm:$0xff] %vm366, %v346
  %372 = vst.msk [vmem:[#allocation2 + $0x28] sm:$0xff] %vm366, %v347
  %373 = vst.msk [vmem:[#allocation2 + $0x30] sm:$0xff] %vm366, %v348
  %374 = vst.msk [vmem:[#allocation2 + $0x38] sm:$0xff] %vm366, %v349
  %s375 = scalar_lea.vmem %s0, 16
  %v376 = vld [vmem:[%s375] sm:$0xf]
  %v377 = vld [vmem:[%s375 + $0x4] sm:$0xf]
  %v378 = vld [vmem:[%s375 + $0x8] sm:$0xf]
  %v379 = vld [vmem:[%s375 + $0xc] sm:$0xf]
  %s380 = scalar_lea.vmem %s1, 16
  %v381 = vld [vmem:[%s380] sm:$0xf]
  %v382 = vld [vmem:[%s380 + $0x4] sm:$0xf]
  %v383 = vld [vmem:[%s380 + $0x8] sm:$0xf]
  %v384 = vld [vmem:[%s380 + $0xc] sm:$0xf]
  %v389 = vunpack.c.l.b16 %v376
  %v390 = vunpack.c.l.b16 %v377
  %v391 = vunpack.c.l.b16 %v378
  %v392 = vunpack.c.l.b16 %v379
  %v393 = vpack.c.b16 %v390, %v389
  %v394 = vpack.c.b16 %v392, %v391
  %397 = vxpose.xlu0.c.b16.start [1/8] %v393, 128
  %398 = vxpose.xlu0.c.b16.cont [2/8] %v394, 128
  %399 = vxpose.xlu0.c.b16.cont [3/8] 0, 128
  %400 = vxpose.xlu0.c.b16.cont [4/8] 0, 128
  %401 = vxpose.xlu0.c.b16.cont [5/8] 0, 128
  %402 = vxpose.xlu0.c.b16.cont [6/8] 0, 128
  %403 = vxpose.xlu0.c.b16.cont [7/8] 0, 128
  %404 = vxpose.xlu0.c.b16.end [8/8] 0, 128
  %v405 = vpop.trf.xlu0
  %v406 = vpop.trf.xlu0
  %v407 = vpop.trf.xlu0
  %v408 = vpop.trf.xlu0
  %v409 = vpop.trf.xlu0
  %v410 = vpop.trf.xlu0
  %v411 = vpop.trf.xlu0
  %v412 = vpop.trf.xlu0
  %v417 = vunpack.c.l.b16 %v381
  %v418 = vunpack.c.l.b16 %v382
  %v419 = vunpack.c.l.b16 %v383
  %v420 = vunpack.c.l.b16 %v384
  %v421 = vpack.c.b16 %v418, %v417
  %v422 = vpack.c.b16 %v420, %v419
  %v426 = vsel %vm75, %v405, 0
  %v429 = vsel %vm75, %v406, 0
  %v432 = vsel %vm75, %v407, 0
  %v435 = vsel %vm75, %v408, 0
  %v438 = vsel %vm75, %v409, 0
  %v441 = vsel %vm75, %v410, 0
  %v444 = vsel %vm75, %v411, 0
  %v447 = vsel %vm75, %v412, 0
  %449 = vmatpush.bf16.msra.mxu0 0
  %450 = vmatpush.bf16.msra.mxu0 0
  %451 = vmatpush.bf16.msra.mxu0 0
  %452 = vmatpush.bf16.msra.mxu0 0
  %453 = vmatpush.bf16.msra.mxu0 0
  %454 = vmatpush.bf16.msra.mxu0 0
  %455 = vmatpush.bf16.msra.mxu0 %v422
  %456 = vmatpush.bf16.msra.mxu0 %v421
  %457 = vmatmul.bf16.gmra.mxu0 %v426
  %v458 = vpop.f32.mrf.mxu0
  %v459 = vadd.f32 0.0, %v458
  %v460 = vpop.f32.mrf.mxu0
  %v461 = vadd.f32 0.0, %v460
  %462 = vmatmul.bf16.gmra.mxu0 %v429
  %v463 = vpop.f32.mrf.mxu0
  %v464 = vadd.f32 0.0, %v463
  %v465 = vpop.f32.mrf.mxu0
  %v466 = vadd.f32 0.0, %v465
  %467 = vmatmul.bf16.gmra.mxu0 %v432
  %v468 = vpop.f32.mrf.mxu0
  %v469 = vadd.f32 0.0, %v468
  %v470 = vpop.f32.mrf.mxu0
  %v471 = vadd.f32 0.0, %v470
  %472 = vmatmul.bf16.gmra.mxu0 %v435
  %v473 = vpop.f32.mrf.mxu0
  %v474 = vadd.f32 0.0, %v473
  %v475 = vpop.f32.mrf.mxu0
  %v476 = vadd.f32 0.0, %v475
  %477 = vmatmul.bf16.gmra.mxu0 %v438
  %v478 = vpop.f32.mrf.mxu0
  %v479 = vadd.f32 0.0, %v478
  %v480 = vpop.f32.mrf.mxu0
  %v481 = vadd.f32 0.0, %v480
  %482 = vmatmul.bf16.gmra.mxu0 %v441
  %v483 = vpop.f32.mrf.mxu0
  %v484 = vadd.f32 0.0, %v483
  %v485 = vpop.f32.mrf.mxu0
  %v486 = vadd.f32 0.0, %v485
  %487 = vmatmul.bf16.gmra.mxu0 %v444
  %v488 = vpop.f32.mrf.mxu0
  %v489 = vadd.f32 0.0, %v488
  %v490 = vpop.f32.mrf.mxu0
  %v491 = vadd.f32 0.0, %v490
  %492 = vmatmul.bf16.gmra.mxu0 %v447
  %v493 = vpop.f32.mrf.mxu0
  %v494 = vadd.f32 0.0, %v493
  %v495 = vpop.f32.mrf.mxu0
  %v496 = vadd.f32 0.0, %v495
  %497 = vdwg.mxu0
  %v498 = vmul.f32 %v459, 0.17677669
  %v499 = vmul.f32 %v461, 0.17677669
  %v500 = vmul.f32 %v464, 0.17677669
  %v501 = vmul.f32 %v466, 0.17677669
  %v502 = vmul.f32 %v469, 0.17677669
  %v503 = vmul.f32 %v471, 0.17677669
  %v504 = vmul.f32 %v474, 0.17677669
  %v505 = vmul.f32 %v476, 0.17677669
  %v506 = vmul.f32 %v479, 0.17677669
  %v507 = vmul.f32 %v481, 0.17677669
  %v508 = vmul.f32 %v484, 0.17677669
  %v509 = vmul.f32 %v486, 0.17677669
  %v510 = vmul.f32 %v489, 0.17677669
  %v511 = vmul.f32 %v491, 0.17677669
  %v512 = vmul.f32 %v494, 0.17677669
  %v513 = vmul.f32 %v496, 0.17677669
  %514 = vmax.xlane.f32.xlu0 %v498
  %v515 = vpop.xlane.xlu0 %514
  %516 = vmax.xlane.f32.xlu0 %v499
  %v517 = vpop.xlane.xlu0 %516
  %518 = vmax.xlane.f32.xlu0 %v500
  %v519 = vpop.xlane.xlu0 %518
  %520 = vmax.xlane.f32.xlu0 %v501
  %v521 = vpop.xlane.xlu0 %520
  %522 = vmax.xlane.f32.xlu0 %v502
  %v523 = vpop.xlane.xlu0 %522
  %524 = vmax.xlane.f32.xlu0 %v503
  %v525 = vpop.xlane.xlu0 %524
  %526 = vmax.xlane.f32.xlu0 %v504
  %v527 = vpop.xlane.xlu0 %526
  %528 = vmax.xlane.f32.xlu0 %v505
  %v529 = vpop.xlane.xlu0 %528
  %530 = vmax.xlane.f32.xlu0 %v506
  %v531 = vpop.xlane.xlu0 %530
  %532 = vmax.xlane.f32.xlu0 %v507
  %v533 = vpop.xlane.xlu0 %532
  %534 = vmax.xlane.f32.xlu0 %v508
  %v535 = vpop.xlane.xlu0 %534
  %536 = vmax.xlane.f32.xlu0 %v509
  %v537 = vpop.xlane.xlu0 %536
  %538 = vmax.xlane.f32.xlu0 %v510
  %v539 = vpop.xlane.xlu0 %538
  %540 = vmax.xlane.f32.xlu0 %v511
  %v541 = vpop.xlane.xlu0 %540
  %542 = vmax.xlane.f32.xlu0 %v512
  %v543 = vpop.xlane.xlu0 %542
  %544 = vmax.xlane.f32.xlu0 %v513
  %v545 = vpop.xlane.xlu0 %544
  %v546 = vsub.f32 %v498, %v515
  %v547 = vsub.f32 %v499, %v517
  %v548 = vsub.f32 %v500, %v519
  %v549 = vsub.f32 %v501, %v521
  %v550 = vsub.f32 %v502, %v523
  %v551 = vsub.f32 %v503, %v525
  %v552 = vsub.f32 %v504, %v527
  %v553 = vsub.f32 %v505, %v529
  %v554 = vsub.f32 %v506, %v531
  %v555 = vsub.f32 %v507, %v533
  %v556 = vsub.f32 %v508, %v535
  %v557 = vsub.f32 %v509, %v537
  %v558 = vsub.f32 %v510, %v539
  %v559 = vsub.f32 %v511, %v541
  %v560 = vsub.f32 %v512, %v543
  %v561 = vsub.f32 %v513, %v545
  %v562 = vmul.f32 %v546, 1.442695
  %v563 = vpow.pop %v562
  %v564 = vmul.f32 %v547, 1.442695
  %v565 = vpow.pop %v564
  %v566 = vmul.f32 %v548, 1.442695
  %v567 = vpow.pop %v566
  %v568 = vmul.f32 %v549, 1.442695
  %v569 = vpow.pop %v568
  %v570 = vmul.f32 %v550, 1.442695
  %v571 = vpow.pop %v570
  %v572 = vmul.f32 %v551, 1.442695
  %v573 = vpow.pop %v572
  %v574 = vmul.f32 %v552, 1.442695
  %v575 = vpow.pop %v574
  %v576 = vmul.f32 %v553, 1.442695
  %v577 = vpow.pop %v576
  %v578 = vmul.f32 %v554, 1.442695
  %v579 = vpow.pop %v578
  %v580 = vmul.f32 %v555, 1.442695
  %v581 = vpow.pop %v580
  %v582 = vmul.f32 %v556, 1.442695
  %v583 = vpow.pop %v582
  %v584 = vmul.f32 %v557, 1.442695
  %v585 = vpow.pop %v584
  %v586 = vmul.f32 %v558, 1.442695
  %v587 = vpow.pop %v586
  %v588 = vmul.f32 %v559, 1.442695
  %v589 = vpow.pop %v588
  %v590 = vmul.f32 %v560, 1.442695
  %v591 = vpow.pop %v590
  %v592 = vmul.f32 %v561, 1.442695
  %v593 = vpow.pop %v592
  %594 = vadd.xlane.f32.xlu0 %v563
  %v595 = vpop.xlane.xlu0 %594
  %596 = vadd.xlane.f32.xlu0 %v565
  %v597 = vpop.xlane.xlu0 %596
  %598 = vadd.xlane.f32.xlu0 %v567
  %v599 = vpop.xlane.xlu0 %598
  %600 = vadd.xlane.f32.xlu0 %v569
  %v601 = vpop.xlane.xlu0 %600
  %602 = vadd.xlane.f32.xlu0 %v571
  %v603 = vpop.xlane.xlu0 %602
  %604 = vadd.xlane.f32.xlu0 %v573
  %v605 = vpop.xlane.xlu0 %604
  %606 = vadd.xlane.f32.xlu0 %v575
  %v607 = vpop.xlane.xlu0 %606
  %608 = vadd.xlane.f32.xlu0 %v577
  %v609 = vpop.xlane.xlu0 %608
  %610 = vadd.xlane.f32.xlu0 %v579
  %v611 = vpop.xlane.xlu0 %610
  %612 = vadd.xlane.f32.xlu0 %v581
  %v613 = vpop.xlane.xlu0 %612
  %614 = vadd.xlane.f32.xlu0 %v583
  %v615 = vpop.xlane.xlu0 %614
  %616 = vadd.xlane.f32.xlu0 %v585
  %v617 = vpop.xlane.xlu0 %616
  %618 = vadd.xlane.f32.xlu0 %v587
  %v619 = vpop.xlane.xlu0 %618
  %620 = vadd.xlane.f32.xlu0 %v589
  %v621 = vpop.xlane.xlu0 %620
  %622 = vadd.xlane.f32.xlu0 %v591
  %v623 = vpop.xlane.xlu0 %622
  %624 = vadd.xlane.f32.xlu0 %v593
  %v625 = vpop.xlane.xlu0 %624
  %v626 = vrcp.pop %v595
  %v627 = vrcp.pop %v597
  %v628 = vrcp.pop %v599
  %v629 = vrcp.pop %v601
  %v630 = vrcp.pop %v603
  %v631 = vrcp.pop %v605
  %v632 = vrcp.pop %v607
  %v633 = vrcp.pop %v609
  %v634 = vrcp.pop %v611
  %v635 = vrcp.pop %v613
  %v636 = vrcp.pop %v615
  %v637 = vrcp.pop %v617
  %v638 = vrcp.pop %v619
  %v639 = vrcp.pop %v621
  %v640 = vrcp.pop %v623
  %v641 = vrcp.pop %v625
  %v642 = vmul.f32 %v563, %v626
  %v643 = vmul.f32 %v565, %v627
  %v644 = vmul.f32 %v567, %v628
  %v645 = vmul.f32 %v569, %v629
  %v646 = vmul.f32 %v571, %v630
  %v647 = vmul.f32 %v573, %v631
  %v648 = vmul.f32 %v575, %v632
  %v649 = vmul.f32 %v577, %v633
  %v650 = vmul.f32 %v579, %v634
  %v651 = vmul.f32 %v581, %v635
  %v652 = vmul.f32 %v583, %v636
  %v653 = vmul.f32 %v585, %v637
  %v654 = vmul.f32 %v587, %v638
  %v655 = vmul.f32 %v589, %v639
  %v656 = vmul.f32 %v591, %v640
  %v657 = vmul.f32 %v593, %v641
  %v658 = vadd.f32 %v642, %v643
  %v659 = vadd.f32 %v658, %v644
  %v660 = vadd.f32 %v659, %v645
  %v661 = vadd.f32 %v660, %v646
  %v662 = vadd.f32 %v661, %v647
  %v663 = vadd.f32 %v662, %v648
  %v664 = vadd.f32 %v663, %v649
  %v665 = vadd.f32 %v664, %v650
  %v666 = vadd.f32 %v665, %v651
  %v667 = vadd.f32 %v666, %v652
  %v668 = vadd.f32 %v667, %v653
  %v669 = vadd.f32 %v668, %v654
  %v670 = vadd.f32 %v669, %v655
  %v671 = vadd.f32 %v670, %v656
  %v672 = vadd.f32 %v671, %v657
  %v673 = vrot.slane %v672, 4
  %v674 = vadd.f32 %v672, %v673
  %v675 = vrot.slane %v674, 2
  %v676 = vadd.f32 %v674, %v675
  %v677 = vrot.slane %v676, 1
  %v678 = vadd.f32 %v676, %v677
  %v679 = vunpack.c.l.bf16 %v381
  %v680 = vunpack.c.l.bf16 %v382
  %v681 = vunpack.c.l.bf16 %v383
  %v682 = vunpack.c.l.bf16 %v384
  %v683 = vmul.f32 %v679, %v678
  %v684 = vmul.f32 %v680, %v678
  %v685 = vmul.f32 %v681, %v678
  %v686 = vmul.f32 %v682, %v678
  %687 = vadd.xlane.f32.xlu0 %v683
  %v688 = vpop.xlane.xlu0 %687
  %689 = vadd.xlane.f32.xlu0 %v684
  %v690 = vpop.xlane.xlu0 %689
  %691 = vadd.xlane.f32.xlu0 %v685
  %v692 = vpop.xlane.xlu0 %691
  %693 = vadd.xlane.f32.xlu0 %v686
  %v694 = vpop.xlane.xlu0 %693
  %v695 = vmul.f32 %v688, 0.0078125
  %v696 = vmul.f32 %v690, 0.0078125
  %v697 = vmul.f32 %v692, 0.0078125
  %v698 = vmul.f32 %v694, 0.0078125
  %v699 = vunpack.c.l.bf16 %v376
  %v700 = vunpack.c.l.bf16 %v377
  %v701 = vunpack.c.l.bf16 %v378
  %v702 = vunpack.c.l.bf16 %v379
  %703 = vadd.xlane.f32.xlu0 %v699
  %v704 = vpop.xlane.xlu0 %703
  %705 = vadd.xlane.f32.xlu0 %v700
  %v706 = vpop.xlane.xlu0 %705
  %707 = vadd.xlane.f32.xlu0 %v701
  %v708 = vpop.xlane.xlu0 %707
  %709 = vadd.xlane.f32.xlu0 %v702
  %v710 = vpop.xlane.xlu0 %709
  %v711 = vmul.f32 %v704, 0.0078125
  %v712 = vmul.f32 %v706, 0.0078125
  %v713 = vmul.f32 %v708, 0.0078125
  %v714 = vmul.f32 %v710, 0.0078125
  %vm715 = vcmask 15368
  %716 = vst.msk [vmem:[#allocation2] sm:$0xff] %vm715, %v711
  %717 = vst.msk [vmem:[#allocation2 + $0x8] sm:$0xff] %vm715, %v712
  %718 = vst.msk [vmem:[#allocation2 + $0x10] sm:$0xff] %vm715, %v713
  %719 = vst.msk [vmem:[#allocation2 + $0x18] sm:$0xff] %vm715, %v714
  %720 = vst.msk [vmem:[#allocation2 + $0x20] sm:$0xff] %vm715, %v695
  %721 = vst.msk [vmem:[#allocation2 + $0x28] sm:$0xff] %vm715, %v696
  %722 = vst.msk [vmem:[#allocation2 + $0x30] sm:$0xff] %vm715, %v697
  %723 = vst.msk [vmem:[#allocation2 + $0x38] sm:$0xff] %vm715, %v698
  %v724 = vld [vmem:[%s3] sm:$0xff]
  %v725 = vld [vmem:[%s3 + $0x8] sm:$0xff]
  %v726 = vld [vmem:[%s3 + $0x10] sm:$0xff]
  %v727 = vld [vmem:[%s3 + $0x18] sm:$0xff]
  %v728 = vld [vmem:[%s3 + $0x20] sm:$0xff]
  %v729 = vld [vmem:[%s3 + $0x28] sm:$0xff]
  %v730 = vld [vmem:[%s3 + $0x30] sm:$0xff]
  %v731 = vld [vmem:[%s3 + $0x38] sm:$0xff]
  %v732 = vld [vmem:[#allocation2] sm:$0xff]
  %v733 = vld [vmem:[#allocation2 + $0x8] sm:$0xff]
  %v734 = vld [vmem:[#allocation2 + $0x10] sm:$0xff]
  %v735 = vld [vmem:[#allocation2 + $0x18] sm:$0xff]
  %v736 = vld [vmem:[#allocation2 + $0x20] sm:$0xff]
  %v737 = vld [vmem:[#allocation2 + $0x28] sm:$0xff]
  %v738 = vld [vmem:[#allocation2 + $0x30] sm:$0xff]
  %v739 = vld [vmem:[#allocation2 + $0x38] sm:$0xff]
  %v740 = vld [vmem:[%s4] sm:$0xff]
  %v741 = vld [vmem:[%s4 + $0x8] sm:$0xff]
  %v742 = vld [vmem:[%s4 + $0x10] sm:$0xff]
  %v743 = vld [vmem:[%s4 + $0x18] sm:$0xff]
  %v744 = vld [vmem:[%s4 + $0x20] sm:$0xff]
  %v745 = vld [vmem:[%s4 + $0x28] sm:$0xff]
  %v746 = vld [vmem:[%s4 + $0x30] sm:$0xff]
  %v747 = vld [vmem:[%s4 + $0x38] sm:$0xff]
  %749 = vset.pattern.permute.xlu0 0
  %750 = vperm.xlu0 %749, %v740
  %v751 = vpop.permute.xlu0 %750
  %754 = vset.pattern.permute.xlu0 0
  %755 = vperm.xlu0 %754, %v741
  %v756 = vpop.permute.xlu0 %755
  %759 = vset.pattern.permute.xlu0 0
  %760 = vperm.xlu0 %759, %v742
  %v761 = vpop.permute.xlu0 %760
  %764 = vset.pattern.permute.xlu0 0
  %765 = vperm.xlu0 %764, %v743
  %v766 = vpop.permute.xlu0 %765
  %769 = vset.pattern.permute.xlu0 0
  %770 = vperm.xlu0 %769, %v744
  %v771 = vpop.permute.xlu0 %770
  %774 = vset.pattern.permute.xlu0 0
  %775 = vperm.xlu0 %774, %v745
  %v776 = vpop.permute.xlu0 %775
  %779 = vset.pattern.permute.xlu0 0
  %780 = vperm.xlu0 %779, %v746
  %v781 = vpop.permute.xlu0 %780
  %784 = vset.pattern.permute.xlu0 0
  %785 = vperm.xlu0 %784, %v747
  %v786 = vpop.permute.xlu0 %785
  %vm788 = vcmask 523264
  %v790 = vsel %vm788, %v724, 0
  %v793 = vsel %vm788, %v725, 0
  %v796 = vsel %vm788, %v726, 0
  %v799 = vsel %vm788, %v727, 0
  %v802 = vsel %vm788, %v728, 0
  %v805 = vsel %vm788, %v729, 0
  %v808 = vsel %vm788, %v730, 0
  %v811 = vsel %vm788, %v731, 0
  %813 = vmatpush.msra.mxu0 0.0
  %814 = vmatpush.msra.mxu0 0.0
  %815 = vmatpush.msra.mxu0 0.0
  %816 = vmatpush.msra.mxu0 0.0
  %817 = vmatpush.msra.mxu0 0.0
  %818 = vmatpush.msra.mxu0 0.0
  %819 = vmatpush.msra.mxu0 0.0
  %820 = vmatpush.msra.mxu0 0.0
  %821 = vmatpush.msra.mxu0 %v739
  %822 = vmatpush.msra.mxu0 %v738
  %823 = vmatpush.msra.mxu0 %v737
  %824 = vmatpush.msra.mxu0 %v736
  %825 = vmatpush.msra.mxu0 %v735
  %826 = vmatpush.msra.mxu0 %v734
  %827 = vmatpush.msra.mxu0 %v733
  %828 = vmatpush.msra.mxu0 %v732
  %829 = vmatmul.f32.gmra.mxu0 %v790
  %v830 = vpop.f32.mrf.mxu0
  %v831 = vadd.f32 %v751, %v830
  %832 = vmatmul.f32.gmra.mxu0 %v793
  %v833 = vpop.f32.mrf.mxu0
  %v834 = vadd.f32 %v756, %v833
  %835 = vmatmul.f32.gmra.mxu0 %v796
  %v836 = vpop.f32.mrf.mxu0
  %v837 = vadd.f32 %v761, %v836
  %838 = vmatmul.f32.gmra.mxu0 %v799
  %v839 = vpop.f32.mrf.mxu0
  %v840 = vadd.f32 %v766, %v839
  %841 = vmatmul.f32.gmra.mxu0 %v802
  %v842 = vpop.f32.mrf.mxu0
  %v843 = vadd.f32 %v771, %v842
  %844 = vmatmul.f32.gmra.mxu0 %v805
  %v845 = vpop.f32.mrf.mxu0
  %v846 = vadd.f32 %v776, %v845
  %847 = vmatmul.f32.gmra.mxu0 %v808
  %v848 = vpop.f32.mrf.mxu0
  %v849 = vadd.f32 %v781, %v848
  %850 = vmatmul.f32.gmra.mxu0 %v811
  %v851 = vpop.f32.mrf.mxu0
  %v852 = vadd.f32 %v786, %v851
  %853 = vdwg.mxu0
  %v854 = vmax.f32 %v831, 0.0
  %v855 = vmax.f32 %v834, 0.0
  %v856 = vmax.f32 %v837, 0.0
  %v857 = vmax.f32 %v840, 0.0
  %v858 = vmax.f32 %v843, 0.0
  %v859 = vmax.f32 %v846, 0.0
  %v860 = vmax.f32 %v849, 0.0
  %v861 = vmax.f32 %v852, 0.0
  %v862 = vld [vmem:[%s5] sm:$0xff]
  %v863 = vld [vmem:[%s5 + $0x8] sm:$0xff]
  %v864 = vld [vmem:[%s6] sm:$0xff]
  %v865 = vld [vmem:[%s6 + $0x8] sm:$0xff]
  %867 = vset.pattern.permute.xlu0 0
  %868 = vperm.xlu0 %867, %v864
  %v869 = vpop.permute.xlu0 %868
  %872 = vset.pattern.permute.xlu0 0
  %873 = vperm.xlu0 %872, %v865
  %v874 = vpop.permute.xlu0 %873
  %v877 = vsel %vm788, %v862, 0
  %v880 = vsel %vm788, %v863, 0
  %882 = vmatpush.msra.mxu0 0.0
  %883 = vmatpush.msra.mxu0 0.0
  %884 = vmatpush.msra.mxu0 0.0
  %885 = vmatpush.msra.mxu0 0.0
  %886 = vmatpush.msra.mxu0 0.0
  %887 = vmatpush.msra.mxu0 0.0
  %888 = vmatpush.msra.mxu0 0.0
  %889 = vmatpush.msra.mxu0 0.0
  %890 = vmatpush.msra.mxu0 %v861
  %891 = vmatpush.msra.mxu0 %v860
  %892 = vmatpush.msra.mxu0 %v859
  %893 = vmatpush.msra.mxu0 %v858
  %894 = vmatpush.msra.mxu0 %v857
  %895 = vmatpush.msra.mxu0 %v856
  %896 = vmatpush.msra.mxu0 %v855
  %897 = vmatpush.msra.mxu0 %v854
  %898 = vmatmul.f32.gmra.mxu0 %v877
  %v899 = vpop.f32.mrf.mxu0
  %v900 = vadd.f32 %v869, %v899
  %901 = vmatmul.f32.gmra.mxu0 %v880
  %v902 = vpop.f32.mrf.mxu0
  %v903 = vadd.f32 %v874, %v902
  %904 = vdwg.mxu0
  %v905 = vld [vmem:[%s2] sm:$0xff]
  %v906 = vld [vmem:[%s2 + $0x8] sm:$0xff]
  %v907 = vadd.f32 %v905, %v900
  %v908 = vadd.f32 %v906, %v903
  %909 = vst.msk [vmem:[%s7] sm:$0xff] %vm366, %v907
  %910 = vst.msk [vmem:[%s7 + $0x8] sm:$0xff] %vm366, %v908
  %s911 = scalar_lea.vmem %s2, 16
  %v912 = vld [vmem:[%s911] sm:$0xff]
  %v913 = vld [vmem:[%s911 + $0x8] sm:$0xff]
  %916 = vrot.lane.b32.xlu0 %v900, 127
  %v917 = vpop.permute.xlu0 %916
  %918 = vrot.lane.b32.xlu0 %v903, 127
  %v919 = vpop.permute.xlu0 %918
  %v922 = vadd.f32 %v912, %v917
  %v923 = vadd.f32 %v913, %v919
  %s924 = scalar_lea.vmem %s7, 16
  %925 = vst.msk [vmem:[%s924] sm:$0xff] %vm366, %v922
  %926 = vst.msk [vmem:[%s924 + $0x8] sm:$0xff] %vm366, %v923
  // Predicated region
  $region30: #{small_net_forward.1} parent=0 // pred_check
    _
  $region31: #{small_net_forward.1} parent=0 // pred_check_branch
    %928 = sbr.rel (0) target = $region33
  $region32: #{small_net_forward.1} parent=0 // pred_region
    _
  $region33: #{small_net_forward.1} parent=0 // pred_fallthru
    _
  // Predicated region
  $region34: #{small_net_forward.1} parent=0 // pred_check
    _
  $region35: #{small_net_forward.1} parent=0 // pred_check_branch
    %930 = sbr.rel (0) target = $region37
  $region36: #{small_net_forward.1} parent=0 // pred_region
    _
  $region37: #{small_net_forward.1} parent=0 // pred_fallthru
    _

</llo_original>
